<compile_context>
chip_gen: v7x
topology: tpu7x:2x2x1
jax: 0.10.0
libtpu: 0.0.40
codegen_flags: <defaults>
</compile_context>

<pallas_src>
import functools

import jax
import jax.numpy as jnp
from jax.experimental import pallas as pl
from jax.experimental.pallas import tpu as pltpu

IMAGENET_MEAN = (0.485, 0.456, 0.406)
IMAGENET_STD = (0.229, 0.224, 0.225)

_LANE = 128
_SUB_U8 = 32                      # uint8 native sublane tile
_VMEM_BUDGET = 10 * 1024 * 1024   # double-buffered in(u8)+out(f32) target


def _round_up(x, m):
    return (x + m - 1) // m * m


def _cdiv(a, b):
    return (a + b - 1) // b


def _choose_row_tile(nr, lane, num_c):
    """Pick the row-tile TR for blocks of shape (C, TR, lane)."""
    lane_pad = _round_up(lane, _LANE)
    # Double-buffered bytes per block: 2 * C * TR * lane_pad * (1 u8 + 4 f32).
    max_tr = (_VMEM_BUDGET // (2 * num_c * 5 * lane_pad)) // _SUB_U8 * _SUB_U8
    max_tr = max(max_tr, _SUB_U8)
    if nr <= 2 * _SUB_U8:
        return nr                 # tiny image: single step, full-extent block
    # Prefer an even number of row tiles (2, 4, 6, ...) that fits the VMEM
    # budget so v7x's two TensorCores get balanced halves of the stream.
    splits = 2
    tr = _round_up(_cdiv(nr, splits), _SUB_U8)
    while tr > max_tr:
        splits += 2
        tr = _round_up(_cdiv(nr, splits), _SUB_U8)
    return tr


def _normalize_kernel(x_ref, o_ref, *, scales, biases):
    # x_ref: (C, TR, L) uint8 raw pixels; o_ref: (C, TR, L) normalized output.
    # Unrolled over the tiny leading channel axis: each statement is a dense
    # (TR, L) vreg op with compile-time scalar affine constants.
    for c in range(len(scales)):
        x = x_ref[c].astype(jnp.float32)
        o_ref[c] = (x * jnp.float32(scales[c])
                    + jnp.float32(biases[c])).astype(o_ref.dtype)


def test_preprocessor_forward(img_hwc_uint8, label, *, out_dtype=jnp.float32):
    """Equivalent of Test_Preprocessor(img_size=None).forward(img, label).

    out_dtype defaults to float32 to match the PyTorch reference; pass
    jnp.bfloat16 to cut the f32 writeback (~40% less HBM traffic) if the
    downstream consumer tolerates it.
    """
    H, W, C = img_hwc_uint8.shape
    hw = H * W

    # Fold ToTensor's 1/255 into Normalize: y = x*scale_c + bias_c.
    scales = tuple(1.0 / (255.0 * s) for s in IMAGENET_STD[:C])
    biases = tuple(-m / s for m, s in zip(IMAGENET_MEAN[:C], IMAGENET_STD[:C]))

    # XLA glue: HWC->CHW permute on uint8 (1 B/px/ch).
    # TODO(synk): if profiling shows this u8 de-interleave as a separate,
    # unfused copy (>~20% of wall), fold it into the kernel via strided loads.
    x = jnp.transpose(img_hwc_uint8, (2, 0, 1))          # (C, H, W) uint8

    # Lane/sublane-dense 3-D view; no physical padding, no output slicing.
    if hw % _LANE == 0:
        nr, lane = hw // _LANE, _LANE
        x = x.reshape(C, nr, lane)                        # free reshape
    else:
        nr, lane = H, W                                   # tile image rows

    tr = _choose_row_tile(nr, lane, C)
    grid = (_cdiv(nr, tr),)

    kernel = functools.partial(_normalize_kernel, scales=scales, biases=biases)
    out = pl.pallas_call(
        kernel,
        out_shape=jax.ShapeDtypeStruct((C, nr, lane), out_dtype),
        grid=grid,
        in_specs=[pl.BlockSpec((C, tr, lane), lambda i: (0, i, 0))],
        out_specs=pl.BlockSpec((C, tr, lane), lambda i: (0, i, 0)),
        compiler_params=pltpu.CompilerParams(
            dimension_semantics=("parallel",)),
    )(x)

    out = out.reshape(C, H, W)                            # free reshape
    # resize_mask is Identity (img_size=None); label is passed through.
    # TODO(synk): the img_size-is-not-None branch (torchvision bilinear/nearest
    # Resize) is not part of this module configuration and is not implemented.
    return out, (None if label is None else label)


def _reference(img_hwc_uint8):
    C = img_hwc_uint8.shape[-1]
    mean = jnp.asarray(IMAGENET_MEAN[:C], jnp.float32).reshape(C, 1, 1)
    std = jnp.asarray(IMAGENET_STD[:C], jnp.float32).reshape(C, 1, 1)
    x = jnp.transpose(img_hwc_uint8, (2, 0, 1)).astype(jnp.float32) / 255.0
    return (x - mean) / std


if __name__ == "__main__":
    key = jax.random.PRNGKey(0)
    k_img, k_lbl, k2, k3, k4 = jax.random.split(key, 5)

    # Small primary example.
    H, W, C = 16, 16, 3
    img = jax.random.randint(k_img, (H, W, C), 0, 256, jnp.int32).astype(jnp.uint8)
    label = jax.random.randint(k_lbl, (H, W), 0, 4, dtype=jnp.int32)

    out_img, out_label = test_preprocessor_forward(img, label)
    out_img = jax.block_until_ready(out_img)
    assert out_img.shape == (C, H, W) and out_img.dtype == jnp.float32
    assert jnp.allclose(out_img, _reference(img), atol=1e-5, rtol=1e-5)
    assert out_label is label

    # None-label path.
    out_img2, out_label2 = test_preprocessor_forward(img, None)
    jax.block_until_ready(out_img2)
    assert out_label2 is None

    # Medium image: dense (C, hw/128, 128) path with 2 grid steps and a ragged
    # (masked) last row-block.
    img_m = jax.random.randint(k2, (224, 224, 3), 0, 256, jnp.int32).astype(jnp.uint8)
    out_m, _ = test_preprocessor_forward(img_m, None)
    out_m = jax.block_until_ready(out_m)
    assert out_m.shape == (3, 224, 224)
    assert jnp.allclose(out_m, _reference(img_m), atol=1e-5, rtol=1e-5)

    # Odd-sized image: hw % 128 != 0 -> (C, H, W) row-tiled fallback path.
    img_o = jax.random.randint(k3, (17, 23, 3), 0, 256, jnp.int32).astype(jnp.uint8)
    out_o, _ = test_preprocessor_forward(img_o, None)
    out_o = jax.block_until_ready(out_o)
    assert out_o.shape == (3, 17, 23)
    assert jnp.allclose(out_o, _reference(img_o), atol=1e-5, rtol=1e-5)

    # HD image: multi-tile (even split) path.
    img_hd = jax.random.randint(k4, (720, 1280, 3), 0, 256, jnp.int32).astype(jnp.uint8)
    out_hd, _ = test_preprocessor_forward(img_hd, None)
    out_hd = jax.block_until_ready(out_hd)
    assert out_hd.shape == (3, 720, 1280)
    assert jnp.allclose(out_hd, _reference(img_hd), atol=1e-5, rtol=1e-5)

    print("KERNEL_OK")
</pallas_src>

<mosaic_0001>
module attributes {stable_mosaic.version = 11 : i64} {
  func.func @_normalize_kernel(%arg0: i32, %arg1: memref<3x2x128xi8, #tpu.memory_space<vmem>>, %arg2: memref<3x2x128xf32, #tpu.memory_space<vmem>>) attributes {dimension_semantics = [#tpu.dimension_semantics<parallel>], iteration_bounds = array<i64: 1>, scalar_prefetch = 0 : i64, scratch_operands = 0 : i64, tpu.core_type = #tpu.core_type<tc>, window_params = [{transform_indices = @transform_0, window_bounds = array<i64: 3, 2, 128>}, {transform_indices = @transform_1, window_bounds = array<i64: 3, 2, 128>}]} {
    %c0 = arith.constant 0 : index
    %c0_0 = arith.constant 0 : index
    %c0_1 = arith.constant 0 : index
    %0 = vector.load %arg1[%c0, %c0_0, %c0_1] : memref<3x2x128xi8, #tpu.memory_space<vmem>>, vector<1x2x128xi8>
    %1 = vector.shape_cast %0 : vector<1x2x128xi8> to vector<2x128xi8>
    %2 = arith.uitofp %1 : vector<2x128xi8> to vector<2x128xf32>
    %cst = arith.constant 0.0171247534 : f32
    %3 = vector.broadcast %cst : f32 to vector<2x128xf32>
    %4 = arith.mulf %2, %3 : vector<2x128xf32>
    %cst_2 = arith.constant -2.11790395 : f32
    %5 = vector.broadcast %cst_2 : f32 to vector<2x128xf32>
    %6 = arith.addf %4, %5 : vector<2x128xf32>
    %c0_3 = arith.constant 0 : index
    %c0_4 = arith.constant 0 : index
    %c0_5 = arith.constant 0 : index
    %7 = vector.load %arg2[%c0_3, %c0_4, %c0_5] : memref<3x2x128xf32, #tpu.memory_space<vmem>>, vector<1x2x128xf32>
    %8 = vector.shape_cast %7 : vector<1x2x128xf32> to vector<2x128xf32>
    %9 = vector.shape_cast %6 : vector<2x128xf32> to vector<1x2x128xf32>
    tpu.vector_store %arg2[%c0_3, %c0_4, %c0_5], %9 {strides = array<i32>} : memref<3x2x128xf32, #tpu.memory_space<vmem>>, vector<1x2x128xf32>,
    %c1 = arith.constant 1 : index
    %c0_6 = arith.constant 0 : index
    %c0_7 = arith.constant 0 : index
    %10 = vector.load %arg1[%c1, %c0_6, %c0_7] : memref<3x2x128xi8, #tpu.memory_space<vmem>>, vector<1x2x128xi8>
    %11 = vector.shape_cast %10 : vector<1x2x128xi8> to vector<2x128xi8>
    %12 = arith.uitofp %11 : vector<2x128xi8> to vector<2x128xf32>
    %cst_8 = arith.constant 0.0175070036 : f32
    %13 = vector.broadcast %cst_8 : f32 to vector<2x128xf32>
    %14 = arith.mulf %12, %13 : vector<2x128xf32>
    %cst_9 = arith.constant -2.03571439 : f32
    %15 = vector.broadcast %cst_9 : f32 to vector<2x128xf32>
    %16 = arith.addf %14, %15 : vector<2x128xf32>
    %c1_10 = arith.constant 1 : index
    %c0_11 = arith.constant 0 : index
    %c0_12 = arith.constant 0 : index
    %17 = vector.load %arg2[%c1_10, %c0_11, %c0_12] : memref<3x2x128xf32, #tpu.memory_space<vmem>>, vector<1x2x128xf32>
    %18 = vector.shape_cast %17 : vector<1x2x128xf32> to vector<2x128xf32>
    %19 = vector.shape_cast %16 : vector<2x128xf32> to vector<1x2x128xf32>
    tpu.vector_store %arg2[%c1_10, %c0_11, %c0_12], %19 {strides = array<i32>} : memref<3x2x128xf32, #tpu.memory_space<vmem>>, vector<1x2x128xf32>,
    %c2 = arith.constant 2 : index
    %c0_13 = arith.constant 0 : index
    %c0_14 = arith.constant 0 : index
    %20 = vector.load %arg1[%c2, %c0_13, %c0_14] : memref<3x2x128xi8, #tpu.memory_space<vmem>>, vector<1x2x128xi8>
    %21 = vector.shape_cast %20 : vector<1x2x128xi8> to vector<2x128xi8>
    %22 = arith.uitofp %21 : vector<2x128xi8> to vector<2x128xf32>
    %cst_15 = arith.constant 0.0174291935 : f32
    %23 = vector.broadcast %cst_15 : f32 to vector<2x128xf32>
    %24 = arith.mulf %22, %23 : vector<2x128xf32>
    %cst_16 = arith.constant -1.80444443 : f32
    %25 = vector.broadcast %cst_16 : f32 to vector<2x128xf32>
    %26 = arith.addf %24, %25 : vector<2x128xf32>
    %c2_17 = arith.constant 2 : index
    %c0_18 = arith.constant 0 : index
    %c0_19 = arith.constant 0 : index
    %27 = vector.load %arg2[%c2_17, %c0_18, %c0_19] : memref<3x2x128xf32, #tpu.memory_space<vmem>>, vector<1x2x128xf32>
    %28 = vector.shape_cast %27 : vector<1x2x128xf32> to vector<2x128xf32>
    %29 = vector.shape_cast %26 : vector<2x128xf32> to vector<1x2x128xf32>
    tpu.vector_store %arg2[%c2_17, %c0_18, %c0_19], %29 {strides = array<i32>} : memref<3x2x128xf32, #tpu.memory_space<vmem>>, vector<1x2x128xf32>,
    return
  }
  func.func @transform_0(%arg0: i32) -> (i32, i32, i32) {
    %c0_i32 = arith.constant 0 : i32
    %c0_i32_0 = arith.constant 0 : i32
    %c0_i32_1 = arith.constant 0 : i32
    return %c0_i32, %arg0, %c0_i32_0 : i32, i32, i32
  }
  func.func @transform_1(%arg0: i32) -> (i32, i32, i32) {
    %c0_i32 = arith.constant 0 : i32
    %c0_i32_0 = arith.constant 0 : i32
    %c0_i32_1 = arith.constant 0 : i32
    return %c0_i32, %arg0, %c0_i32_0 : i32, i32, i32
  }
}

</mosaic_0001>

<llo_original>
// kernel: tpu_custom_call.1
$region0: #{tpu_custom_call.1}
  #allocation0 [shape = 'u32[]', space=smem, size = 0x4, offset = 0x4, fixed_abs, tag = 'smem constant byte address 0x4 - core index']
  #allocation1 [shape = 'u32[144,128]{1,0:T(1,128)}', space=vmem, size = 0x12000, scoped, tag = 'internal scratch']
  %s0 = inlined_call_operand.vmem [shape: u8[3,2,128], index: 0, kind: input, shape index: {}]
  %s1 = inlined_call_operand.hbm [shape: f32[3,2,128], index: 1, kind: output, shape index: {}]
  %s2 = sld [smem:[#allocation0]]
  $region14: #{tpu_custom_call.1} parent=0
    _
  %s4 = ssub.s32 1, %s2
  %s5 = scalar_select 0, %s4, %s2
  $region1: #{tpu_custom_call.1} parent=0
    #allocation2 [shape = 'u8[3072]{0}', space=vmem, size = 0xc00, scoped, tag = 'output window, operand 0, single buffered']
    #allocation3 [shape = 's32[1]{0}', space=sflag, size = 0x4, scoped, tag = 'scoped memory for tpu_custom_call.1']
    %6 = vsyncpa [#allocation3], 0
    // Predicated region
    $region2: #{tpu_custom_call.1} parent=1 // pred_check
      _
    $region3: #{tpu_custom_call.1} parent=1 // pred_check_branch
      %8 = sbr.rel (0) target = $region5
    $region4: #{tpu_custom_call.1} parent=1 // pred_region
      _
    $region5: #{tpu_custom_call.1} parent=1 // pred_fallthru
      _
    %v9 = vld [vmem:[%s0] sm:$0x1]
    %v10 = vunpack.c.0.s8 %v9
    %v11 = vand.u32 %v10, 255
    %v12 = vcvt.s32.f32 %v11
    %v13 = vmul.f32 %v12, 0.017124753
    %v14 = vadd.f32 %v13, -2.117904
    %15 = vst [vmem:[#allocation2] sm:$0x3] %v14
    %s16 = scalar_lea.vmem %s0, 1
    %v17 = vld [vmem:[%s16] sm:$0x1]
    %v18 = vunpack.c.0.s8 %v17
    %v19 = vand.u32 %v18, 255
    %v20 = vcvt.s32.f32 %v19
    %v21 = vmul.f32 %v20, 0.017507004
    %v22 = vadd.f32 %v21, -2.0357144
    %s23 = scalar_lea.vmem [#allocation2], 2
    %24 = vst [vmem:[%s23] sm:$0x3] %v22
    %s25 = scalar_lea.vmem %s0, 2
    %v26 = vld [vmem:[%s25] sm:$0x1]
    %v27 = vunpack.c.0.s8 %v26
    %v28 = vand.u32 %v27, 255
    %v29 = vcvt.s32.f32 %v28
    %v30 = vmul.f32 %v29, 0.017429193
    %v31 = vadd.f32 %v30, -1.8044444
    %s32 = scalar_lea.vmem [#allocation2], 4
    %33 = vst [vmem:[%s32] sm:$0x3] %v31
    // Predicated region
    $region6: #{tpu_custom_call.1} parent=1 // pred_check
      _
    $region7: #{tpu_custom_call.1} parent=1 // pred_check_branch
      %35 = sbr.rel (0) target = $region9
    $region8: #{tpu_custom_call.1} parent=1 // pred_region
      %s37 = ssub.s32 96, 96
      %38 = vsyncadd [#allocation3], %s37
      %s39 = sshll.u32 [#allocation2], 4
      %s40 = int_to_ptr.vmem [resolvable:$true] %s39
      %45 = dma.vmem_to_hbm [thread:$0]  %s40, 96, %s1, [#allocation3], 32, 32, 2
    $region9: #{tpu_custom_call.1} parent=1 // pred_fallthru
      _
    // Predicated region
    $region10: #{tpu_custom_call.1} parent=1 // pred_check
      _
    $region11: #{tpu_custom_call.1} parent=1 // pred_check_branch
      %47 = sbr.rel (0) target = $region13
    $region12: #{tpu_custom_call.1} parent=1 // pred_region
      %48 = dma.done [#allocation3], 96
    $region13: #{tpu_custom_call.1} parent=1 // pred_fallthru
      _
    %49 = vsyncpa [#allocation3], 1

</llo_original>
